<compile_context>
chip_gen: v6e
topology: v6e:2x2x1
jax: 0.10.0
libtpu: 0.0.40
codegen_flags: <defaults>
</compile_context>

<pallas_src>
import functools

import jax
import jax.numpy as jnp
from jax.experimental import pallas as pl
from jax.experimental.pallas import tpu as pltpu

# ---------------- configuration (small synthetic shapes) ----------------
N_OBJ = 16
HID_DIM = 32
N_KP = 8
CUBE_SCALE = 1.5
B = 2
EPS = 1e-12  # F.normalize eps

# -------- packed lane layout (everything padded to one 128-lane slab) ----
LANES = 128
POS_W = 3 * N_KP                      # 24 : pos channels (x|y|z, channel-major)
QUAT_W = 4 * N_KP                     # 32 : quaternion channels
LRF_END = 8 * N_KP                    # 64 : end of decode outputs
OUT_GROUPED = 11 * N_KP               # 88 : canon(24)|kp_pos(24)|rot(32)|mir(8)
OUT_LAT_END = OUT_GROUPED + HID_DIM   # 120: + latent(32)
assert LRF_END <= LANES and OUT_LAT_END <= LANES
assert HID_DIM + 4 <= LANES           # gather table: emb | scale | offset(3)


# ---------------------------- Pallas kernel -----------------------------
def detector_kernel(idx_ref, table_ref, w_ref, b_ref, out_ref):
    """Fused encode-gather + decode + tanh + centering + scale/offset + lrf.

    Refs (all VMEM):
      idx_ref   : [B, 1]      int32 object indices
      table_ref : [N_OBJ, 128] packed (emb | scale | offset | pad)
      w_ref     : [HID_DIM, 128] packed decode weights (pos | quat | mir | pad)
      b_ref     : [1, 128]      packed decode bias
      out_ref   : [B, 128]      packed output slab
    """
    bsz = idx_ref.shape[0]
    n_obj = table_ref.shape[0]

    # ---- encode(idx) + scale_emb(idx) + offset_emb(idx): one-hot matmul ----
    obj_ids = jax.lax.broadcasted_iota(jnp.int32, (bsz, n_obj), 1)
    onehot = (idx_ref[...] == obj_ids).astype(jnp.float32)        # [B, n_obj]
    gathered = jnp.dot(onehot, table_ref[...],
                       preferred_element_type=jnp.float32)        # [B, 128]
    latent = gathered[:, :HID_DIM]                                # [B, H]
    scale = gathered[:, HID_DIM:HID_DIM + 1]                      # [B, 1]

    # ---- decode: single fused MXU matmul for pos + quaternion + mirror ----
    raw = jnp.dot(latent, w_ref[...],
                  preferred_element_type=jnp.float32) + b_ref[...]  # [B, 128]

    # ---- position branch (channel-major lanes 0:24) ----
    kp = CUBE_SCALE * jnp.tanh(raw[:, :POS_W])                    # [B, 24]
    canon_parts = []
    kppos_parts = []
    for c in range(3):
        kc = kp[:, c * N_KP:(c + 1) * N_KP]                       # [B, K]
        mx = jnp.max(kc, axis=-1, keepdims=True)
        mn = jnp.min(kc, axis=-1, keepdims=True)
        cc = kc - (mx + mn) * 0.5                                 # center_canonical
        off_c = gathered[:, HID_DIM + 1 + c:HID_DIM + 2 + c]      # [B, 1]
        canon_parts.append(cc)
        kppos_parts.append(scale * cc + off_c)

    # ---- lrf branch (quaternion lanes 24:56, mirror lanes 56:64) ----
    q = raw[:, POS_W:POS_W + QUAT_W]                              # [B, 32]
    q0 = q[:, 0 * N_KP:1 * N_KP]
    q1 = q[:, 1 * N_KP:2 * N_KP]
    q2 = q[:, 2 * N_KP:3 * N_KP]
    q3 = q[:, 3 * N_KP:4 * N_KP]
    normsq = q0 * q0 + q1 * q1 + q2 * q2 + q3 * q3                # [B, K]
    # 1 / max(||q||, eps)  ==  rsqrt(max(||q||^2, eps^2))   (EUP, not VPU div)
    inv = jax.lax.rsqrt(jnp.maximum(normsq, EPS * EPS))           # [B, K]
    rot = q * jnp.concatenate([inv, inv, inv, inv], axis=-1)      # [B, 32]
    mir = jax.nn.sigmoid(raw[:, POS_W + QUAT_W:LRF_END])          # [B, K]

    # ---- single lane-dense output slab, padded to 128 lanes ----
    pad = jnp.zeros((bsz, LANES - OUT_LAT_END), jnp.float32)
    out_ref[...] = jnp.concatenate(
        canon_parts + kppos_parts + [rot, mir, latent, pad], axis=-1)


# --------------------- one-time parameter packing -------------------------
def pack_detector_params(emb_table, w_pos, b_pos, w_lrf, b_lrf,
                         scale_table, offset_table):
    """Pack params into the lane-dense layouts the kernel expects.

    Called once outside the jitted hot path.
    """
    n_obj, hid = emb_table.shape
    k = w_pos.shape[-1]

    gather_table = jnp.zeros((n_obj, LANES), jnp.float32)
    gather_table = gather_table.at[:, :hid].set(emb_table)
    gather_table = gather_table.at[:, hid:hid + 1].set(scale_table)
    gather_table = gather_table.at[:, hid + 1:hid + 4].set(offset_table)

    w_dec = jnp.zeros((hid, LANES), jnp.float32)
    w_dec = w_dec.at[:, :3 * k].set(
        jnp.transpose(w_pos, (1, 0, 2)).reshape(hid, 3 * k))
    w_dec = w_dec.at[:, 3 * k:7 * k].set(
        jnp.transpose(w_lrf[:4], (1, 0, 2)).reshape(hid, 4 * k))
    w_dec = w_dec.at[:, 7 * k:8 * k].set(w_lrf[4])

    b_dec = jnp.zeros((1, LANES), jnp.float32)
    b_dec = b_dec.at[:, :3 * k].set(
        jnp.transpose(b_pos, (1, 0, 2)).reshape(1, 3 * k))
    b_dec = b_dec.at[:, 3 * k:7 * k].set(
        jnp.transpose(b_lrf[:4], (1, 0, 2)).reshape(1, 4 * k))
    b_dec = b_dec.at[:, 7 * k:8 * k].set(b_lrf[4])

    return gather_table, w_dec, b_dec


# ----------------------------- jitted forward -----------------------------
@jax.jit
def detector_forward(idx, gather_table, w_dec, b_dec):
    """Equivalent of Detector.forward(idx, ..., return_kp_pos=True,
    return_latent=True, apply_scale=True, apply_offset=True)."""
    bsz = idx.shape[0]
    idx2 = idx.astype(jnp.int32).reshape(bsz, 1)

    vmem = pl.BlockSpec(memory_space=pltpu.MemorySpace.VMEM)
    slab = pl.pallas_call(
        detector_kernel,
        out_shape=jax.ShapeDtypeStruct((bsz, LANES), jnp.float32),
        in_specs=[vmem, vmem, vmem, vmem],
        out_specs=vmem,
    )(idx2, gather_table, w_dec, b_dec)

    # One slice + reshape + transpose recovers the [B, K, C] convention;
    # padded lanes (120:128) are never read.
    grouped = jnp.transpose(
        slab[:, :OUT_GROUPED].reshape(bsz, 11, N_KP), (0, 2, 1))  # [B, K, 11]
    res = {
        "kp_latent": slab[:, OUT_GROUPED:OUT_LAT_END],            # [B, H]
        "canonical_kp_pos": grouped[..., 0:3],                    # [B, K, 3]
        "kp_pos": grouped[..., 3:6],                              # [B, K, 3]
        "kp_rot": grouped[..., 6:10],                             # [B, K, 4]
        "kp_mir": grouped[..., 10:11],                            # [B, K, 1]
    }
    return res


# --------------------------- pure-JAX reference ---------------------------
def detector_forward_ref(idx, emb_table, w_pos, b_pos, w_lrf, b_lrf,
                         scale_table, offset_table):
    latent = emb_table[idx]
    scale = scale_table[idx]
    offset = offset_table[idx]

    pos = jnp.einsum("bh,chk->bkc", latent, w_pos) + jnp.transpose(b_pos, (1, 2, 0))
    kp = CUBE_SCALE * jnp.tanh(pos)                          # [B, K, 3]
    center = (kp.max(axis=1, keepdims=True) + kp.min(axis=1, keepdims=True)) / 2
    canon = kp - center
    kp_pos = scale[:, None] * canon + offset[:, None]

    lrf = jnp.einsum("bh,chk->bkc", latent, w_lrf) + jnp.transpose(b_lrf, (1, 2, 0))
    q = lrf[..., :4]
    q = q / jnp.maximum(jnp.linalg.norm(q, axis=-1, keepdims=True), EPS)
    mir = jax.nn.sigmoid(lrf[..., 4:])
    return {
        "kp_latent": latent,
        "canonical_kp_pos": canon,
        "kp_pos": kp_pos,
        "kp_rot": q,
        "kp_mir": mir,
    }


# ---------------------------------- main ----------------------------------
if __name__ == "__main__":
    key = jax.random.PRNGKey(0)
    k0, k1, k2, k3, k4, k5, k6 = jax.random.split(key, 7)

    # Deterministic synthetic parameters (no checkpoint loading).
    emb_table = 0.5 * jax.random.normal(k0, (N_OBJ, HID_DIM), jnp.float32)
    w_pos = 0.1 * jax.random.normal(k1, (3, HID_DIM, N_KP), jnp.float32)
    b_pos = 0.1 * jax.random.normal(k2, (3, 1, N_KP), jnp.float32)
    w_lrf = 0.1 * jax.random.normal(k3, (5, HID_DIM, N_KP), jnp.float32)
    b_lrf = 0.1 * jax.random.normal(k4, (5, 1, N_KP), jnp.float32)
    scale_table = 1.0 + 0.1 * jax.random.normal(k5, (N_OBJ, 1), jnp.float32)
    offset_table = 0.2 * jax.random.normal(k6, (N_OBJ, 3), jnp.float32)

    idx = jnp.array([3, 7], dtype=jnp.int32)     # [B]

    # One-time packing into lane-dense kernel layouts (outside the hot path).
    gather_table, w_dec, b_dec = pack_detector_params(
        emb_table, w_pos, b_pos, w_lrf, b_lrf, scale_table, offset_table)

    out = detector_forward(idx, gather_table, w_dec, b_dec)
    out = jax.tree_util.tree_map(jax.block_until_ready, out)

    ref = detector_forward_ref(idx, emb_table, w_pos, b_pos, w_lrf, b_lrf,
                               scale_table, offset_table)
    for name in ("kp_latent", "canonical_kp_pos", "kp_pos", "kp_rot", "kp_mir"):
        got, want = out[name], ref[name]
        assert got.shape == want.shape, (name, got.shape, want.shape)
        assert jnp.allclose(got, want, atol=1e-5, rtol=1e-5), name

    # TODO(synk): prior network (return_prior path) and the stateful cache
    # buffers (use_cache) are not implemented — prior=None / use_cache=False.
    print("KERNEL_OK")
</pallas_src>

<mosaic_0001>
module attributes {stable_mosaic.version = 11 : i64} {
  func.func @detector_kernel(%arg0: memref<2x1xi32, #tpu.memory_space<vmem>>, %arg1: memref<16x128xf32, #tpu.memory_space<vmem>>, %arg2: memref<32x128xf32, #tpu.memory_space<vmem>>, %arg3: memref<1x128xf32, #tpu.memory_space<vmem>>, %arg4: memref<2x128xf32, #tpu.memory_space<vmem>>) attributes {dimension_semantics = [], scalar_prefetch = 0 : i64, scratch_operands = 0 : i64, tpu.core_type = #tpu.core_type<tc>} {
    %0 = tpu.iota {dimensions = array<i32: 1>} : vector<2x16xi32>
    %c0 = arith.constant 0 : index
    %c0_0 = arith.constant 0 : index
    %1 = vector.load %arg0[%c0, %c0_0] : memref<2x1xi32, #tpu.memory_space<vmem>>, vector<2x1xi32>
    %2 = vector.broadcast %1 : vector<2x1xi32> to vector<2x16xi32>
    %3 = arith.cmpi eq, %2, %0 : vector<2x16xi32>
    %4 = arith.extui %3 : vector<2x16xi1> to vector<2x16xi32>
    %5 = arith.sitofp %4 : vector<2x16xi32> to vector<2x16xf32>
    %c0_1 = arith.constant 0 : index
    %c0_2 = arith.constant 0 : index
    %6 = vector.load %arg1[%c0_1, %c0_2] : memref<16x128xf32, #tpu.memory_space<vmem>>, vector<16x128xf32>
    %cst = arith.constant dense<0.000000e+00> : vector<2x128xf32>
    %7 = tpu.matmul %5, %6, %cst {dimension_numbers = #tpu.dot_dimension_numbers<[1], [0], [0], [1], [0, 0, 1, 1], [], []>} : vector<2x16xf32>, vector<16x128xf32>, vector<2x128xf32> -> vector<2x128xf32>
    %8 = vector.extract_strided_slice %7 {offsets = [0, 0], sizes = [2, 32], strides = [1, 1]} : vector<2x128xf32> to vector<2x32xf32>
    %9 = vector.extract_strided_slice %7 {offsets = [0, 32], sizes = [2, 1], strides = [1, 1]} : vector<2x128xf32> to vector<2x1xf32>
    %c0_3 = arith.constant 0 : index
    %c0_4 = arith.constant 0 : index
    %10 = vector.load %arg2[%c0_3, %c0_4] : memref<32x128xf32, #tpu.memory_space<vmem>>, vector<32x128xf32>
    %cst_5 = arith.constant dense<0.000000e+00> : vector<2x128xf32>
    %11 = tpu.matmul %8, %10, %cst_5 {dimension_numbers = #tpu.dot_dimension_numbers<[1], [0], [0], [1], [0, 0, 1, 1], [], []>} : vector<2x32xf32>, vector<32x128xf32>, vector<2x128xf32> -> vector<2x128xf32>
    %c0_6 = arith.constant 0 : index
    %c0_7 = arith.constant 0 : index
    %12 = vector.load %arg3[%c0_6, %c0_7] : memref<1x128xf32, #tpu.memory_space<vmem>>, vector<1x128xf32>
    %13 = vector.broadcast %12 : vector<1x128xf32> to vector<2x128xf32>
    %14 = arith.addf %11, %13 : vector<2x128xf32>
    %15 = vector.extract_strided_slice %14 {offsets = [0, 0], sizes = [2, 24], strides = [1, 1]} : vector<2x128xf32> to vector<2x24xf32>
    %16 = math.tanh %15 : vector<2x24xf32>
    %cst_8 = arith.constant 1.500000e+00 : f32
    %17 = vector.broadcast %cst_8 : f32 to vector<2x24xf32>
    %18 = arith.mulf %17, %16 : vector<2x24xf32>
    %19 = vector.extract_strided_slice %18 {offsets = [0, 0], sizes = [2, 8], strides = [1, 1]} : vector<2x24xf32> to vector<2x8xf32>
    %cst_9 = arith.constant dense<0xFF800000> : vector<2xf32>
    %20 = vector.multi_reduction <maximumf>, %19, %cst_9 [1] : vector<2x8xf32> to vector<2xf32>
    %21 = vector.shape_cast %20 : vector<2xf32> to vector<2x1xf32>
    %cst_10 = arith.constant dense<0x7F800000> : vector<2xf32>
    %22 = vector.multi_reduction <minimumf>, %19, %cst_10 [1] : vector<2x8xf32> to vector<2xf32>
    %23 = vector.shape_cast %22 : vector<2xf32> to vector<2x1xf32>
    %24 = arith.addf %21, %23 : vector<2x1xf32>
    %cst_11 = arith.constant 5.000000e-01 : f32
    %25 = vector.broadcast %cst_11 : f32 to vector<2x1xf32>
    %26 = arith.mulf %24, %25 : vector<2x1xf32>
    %27 = vector.broadcast %26 : vector<2x1xf32> to vector<2x8xf32>
    %28 = arith.subf %19, %27 : vector<2x8xf32>
    %29 = vector.extract_strided_slice %7 {offsets = [0, 33], sizes = [2, 1], strides = [1, 1]} : vector<2x128xf32> to vector<2x1xf32>
    %30 = vector.broadcast %9 : vector<2x1xf32> to vector<2x8xf32>
    %31 = arith.mulf %30, %28 : vector<2x8xf32>
    %32 = vector.broadcast %29 : vector<2x1xf32> to vector<2x8xf32>
    %33 = arith.addf %31, %32 : vector<2x8xf32>
    %34 = vector.extract_strided_slice %18 {offsets = [0, 8], sizes = [2, 8], strides = [1, 1]} : vector<2x24xf32> to vector<2x8xf32>
    %cst_12 = arith.constant dense<0xFF800000> : vector<2xf32>
    %35 = vector.multi_reduction <maximumf>, %34, %cst_12 [1] : vector<2x8xf32> to vector<2xf32>
    %36 = vector.shape_cast %35 : vector<2xf32> to vector<2x1xf32>
    %cst_13 = arith.constant dense<0x7F800000> : vector<2xf32>
    %37 = vector.multi_reduction <minimumf>, %34, %cst_13 [1] : vector<2x8xf32> to vector<2xf32>
    %38 = vector.shape_cast %37 : vector<2xf32> to vector<2x1xf32>
    %39 = arith.addf %36, %38 : vector<2x1xf32>
    %cst_14 = arith.constant 5.000000e-01 : f32
    %40 = vector.broadcast %cst_14 : f32 to vector<2x1xf32>
    %41 = arith.mulf %39, %40 : vector<2x1xf32>
    %42 = vector.broadcast %41 : vector<2x1xf32> to vector<2x8xf32>
    %43 = arith.subf %34, %42 : vector<2x8xf32>
    %44 = vector.extract_strided_slice %7 {offsets = [0, 34], sizes = [2, 1], strides = [1, 1]} : vector<2x128xf32> to vector<2x1xf32>
    %45 = vector.broadcast %9 : vector<2x1xf32> to vector<2x8xf32>
    %46 = arith.mulf %45, %43 : vector<2x8xf32>
    %47 = vector.broadcast %44 : vector<2x1xf32> to vector<2x8xf32>
    %48 = arith.addf %46, %47 : vector<2x8xf32>
    %49 = vector.extract_strided_slice %18 {offsets = [0, 16], sizes = [2, 8], strides = [1, 1]} : vector<2x24xf32> to vector<2x8xf32>
    %cst_15 = arith.constant dense<0xFF800000> : vector<2xf32>
    %50 = vector.multi_reduction <maximumf>, %49, %cst_15 [1] : vector<2x8xf32> to vector<2xf32>
    %51 = vector.shape_cast %50 : vector<2xf32> to vector<2x1xf32>
    %cst_16 = arith.constant dense<0x7F800000> : vector<2xf32>
    %52 = vector.multi_reduction <minimumf>, %49, %cst_16 [1] : vector<2x8xf32> to vector<2xf32>
    %53 = vector.shape_cast %52 : vector<2xf32> to vector<2x1xf32>
    %54 = arith.addf %51, %53 : vector<2x1xf32>
    %cst_17 = arith.constant 5.000000e-01 : f32
    %55 = vector.broadcast %cst_17 : f32 to vector<2x1xf32>
    %56 = arith.mulf %54, %55 : vector<2x1xf32>
    %57 = vector.broadcast %56 : vector<2x1xf32> to vector<2x8xf32>
    %58 = arith.subf %49, %57 : vector<2x8xf32>
    %59 = vector.extract_strided_slice %7 {offsets = [0, 35], sizes = [2, 1], strides = [1, 1]} : vector<2x128xf32> to vector<2x1xf32>
    %60 = vector.broadcast %9 : vector<2x1xf32> to vector<2x8xf32>
    %61 = arith.mulf %60, %58 : vector<2x8xf32>
    %62 = vector.broadcast %59 : vector<2x1xf32> to vector<2x8xf32>
    %63 = arith.addf %61, %62 : vector<2x8xf32>
    %64 = vector.extract_strided_slice %14 {offsets = [0, 24], sizes = [2, 32], strides = [1, 1]} : vector<2x128xf32> to vector<2x32xf32>
    %65 = vector.extract_strided_slice %64 {offsets = [0, 0], sizes = [2, 8], strides = [1, 1]} : vector<2x32xf32> to vector<2x8xf32>
    %66 = vector.extract_strided_slice %64 {offsets = [0, 8], sizes = [2, 8], strides = [1, 1]} : vector<2x32xf32> to vector<2x8xf32>
    %67 = vector.extract_strided_slice %64 {offsets = [0, 16], sizes = [2, 8], strides = [1, 1]} : vector<2x32xf32> to vector<2x8xf32>
    %68 = vector.extract_strided_slice %64 {offsets = [0, 24], sizes = [2, 8], strides = [1, 1]} : vector<2x32xf32> to vector<2x8xf32>
    %69 = arith.mulf %65, %65 : vector<2x8xf32>
    %70 = arith.mulf %66, %66 : vector<2x8xf32>
    %71 = arith.addf %69, %70 : vector<2x8xf32>
    %72 = arith.mulf %67, %67 : vector<2x8xf32>
    %73 = arith.addf %71, %72 : vector<2x8xf32>
    %74 = arith.mulf %68, %68 : vector<2x8xf32>
    %75 = arith.addf %73, %74 : vector<2x8xf32>
    %cst_18 = arith.constant 1.000000e-24 : f32
    %76 = vector.broadcast %cst_18 : f32 to vector<2x8xf32>
    %77 = arith.maximumf %75, %76 : vector<2x8xf32>
    %78 = math.rsqrt %77 : vector<2x8xf32>
    %79 = tpu.concatenate %78, %78, %78, %78 in 1 : vector<2x8xf32>, vector<2x8xf32>, vector<2x8xf32>, vector<2x8xf32> -> vector<2x32xf32>
    %80 = arith.mulf %64, %79 : vector<2x32xf32>
    %81 = vector.extract_strided_slice %14 {offsets = [0, 56], sizes = [2, 8], strides = [1, 1]} : vector<2x128xf32> to vector<2x8xf32>
    %82 = arith.negf %81 : vector<2x8xf32>
    %83 = math.exp %82 : vector<2x8xf32>
    %cst_19 = arith.constant 1.000000e+00 : f32
    %84 = vector.broadcast %cst_19 : f32 to vector<2x8xf32>
    %85 = arith.addf %84, %83 : vector<2x8xf32>
    %86 = arith.divf %84, %85 : vector<2x8xf32>
    %cst_20 = arith.constant 0.000000e+00 : f32
    %87 = vector.broadcast %cst_20 : f32 to vector<2x8xf32>
    %88 = tpu.concatenate %28, %43, %58, %33, %48, %63, %80, %86, %8, %87 in 1 : vector<2x8xf32>, vector<2x8xf32>, vector<2x8xf32>, vector<2x8xf32>, vector<2x8xf32>, vector<2x8xf32>, vector<2x32xf32>, vector<2x8xf32>, vector<2x32xf32>, vector<2x8xf32> -> vector<2x128xf32>
    %c0_21 = arith.constant 0 : index
    %c0_22 = arith.constant 0 : index
    %89 = vector.load %arg4[%c0_21, %c0_22] : memref<2x128xf32, #tpu.memory_space<vmem>>, vector<2x128xf32>
    tpu.vector_store %arg4[%c0_21, %c0_22], %88 {strides = array<i32>} : memref<2x128xf32, #tpu.memory_space<vmem>>, vector<2x128xf32>,
    return
  }
}

</mosaic_0001>

<llo_original>
// kernel: detector_forward.1
$region0: #{detector_forward.1}
  #allocation0 [shape = 'u32[]', space=smem, size = 0x4, offset = 0x4, fixed_abs, tag = 'smem constant byte address 0x4 - core index']
  #allocation1 [shape = 'u32[144,128]{1,0:T(1,128)}', space=vmem, size = 0x12000, scoped, tag = 'internal scratch']
  %s0 = inlined_call_operand.vmem [shape: s32[2,1], index: 0, kind: input, shape index: {}]
  %s1 = inlined_call_operand.hbm [shape: f32[16,128], index: 1, kind: input, shape index: {}]
  %s2 = inlined_call_operand.hbm [shape: f32[32,128], index: 2, kind: input, shape index: {}]
  %s3 = inlined_call_operand.vmem [shape: f32[1,128], index: 3, kind: input, shape index: {}]
  %s4 = inlined_call_operand.vmem [shape: f32[2,128], index: 4, kind: output, shape index: {}]
  %s5 = sld [smem:[#allocation0]]
  $region34: #{detector_forward.1} parent=0
    _
  %s7 = ssub.s32 1, %s5
  %s8 = scalar_select 0, %s7, %s5
  $region1: #{detector_forward.1} parent=0
    #allocation2 [shape = 'u8[8192]{0}', space=vmem, size = 0x2000, scoped, tag = 'input window, operand 1, single buffered']
    #allocation3 [shape = 's32[1]{0}', space=sflag, size = 0x4, scoped, tag = 'scoped memory for detector_forward.1']
    #allocation4 [shape = 'u8[16384]{0}', space=vmem, size = 0x4000, scoped, tag = 'input window, operand 2, single buffered']
    #allocation5 [shape = 's32[1]{0}', space=sflag, size = 0x4, scoped, tag = 'scoped memory for detector_forward.1']
    %9 = vsyncpa [#allocation3], 0
    %10 = vsyncpa [#allocation5], 0
    // Predicated region
    $region2: #{detector_forward.1} parent=1 // pred_check
      _
    $region3: #{detector_forward.1} parent=1 // pred_check_branch
      %12 = sbr.rel (0) target = $region5
    $region4: #{detector_forward.1} parent=1 // pred_region
      _
    $region5: #{detector_forward.1} parent=1 // pred_fallthru
      _
    // Predicated region
    $region6: #{detector_forward.1} parent=1 // pred_check
      _
    $region7: #{detector_forward.1} parent=1 // pred_check_branch
      %14 = sbr.rel (0) target = $region9
    $region8: #{detector_forward.1} parent=1 // pred_region
      %s16 = ssub.s32 256, 256
      %17 = vsyncadd [#allocation3], %s16
      %s18 = sshll.u32 [#allocation2], 4
      %s19 = int_to_ptr.vmem [resolvable:$true] %s18
      %24 = dma.hbm_to_vmem [thread:$0]  %s1, 256, %s19, [#allocation3], 128, 128, 8
    $region9: #{detector_forward.1} parent=1 // pred_fallthru
      _
    // Predicated region
    $region10: #{detector_forward.1} parent=1 // pred_check
      _
    $region11: #{detector_forward.1} parent=1 // pred_check_branch
      %26 = sbr.rel (0) target = $region13
    $region12: #{detector_forward.1} parent=1 // pred_region
      %s28 = ssub.s32 512, 512
      %29 = vsyncadd [#allocation5], %s28
      %s30 = sshll.u32 [#allocation4], 4
      %s31 = int_to_ptr.vmem [resolvable:$true] %s30
      %36 = dma.hbm_to_vmem [thread:$0]  %s2, 512, %s31, [#allocation5], 128, 128, 8
    $region13: #{detector_forward.1} parent=1 // pred_fallthru
      _
    // Predicated region
    $region14: #{detector_forward.1} parent=1 // pred_check
      _
    $region15: #{detector_forward.1} parent=1 // pred_check_branch
      %38 = sbr.rel (0) target = $region17
    $region16: #{detector_forward.1} parent=1 // pred_region
      _
    $region17: #{detector_forward.1} parent=1 // pred_fallthru
      _
    // Predicated region
    $region18: #{detector_forward.1} parent=1 // pred_check
      _
    $region19: #{detector_forward.1} parent=1 // pred_check_branch
      %40 = sbr.rel (0) target = $region21
    $region20: #{detector_forward.1} parent=1 // pred_region
      %41 = dma.done [#allocation3], 256
    $region21: #{detector_forward.1} parent=1 // pred_fallthru
      _
    // Predicated region
    $region22: #{detector_forward.1} parent=1 // pred_check
      _
    $region23: #{detector_forward.1} parent=1 // pred_check_branch
      %43 = sbr.rel (0) target = $region25
    $region24: #{detector_forward.1} parent=1 // pred_region
      %44 = dma.done [#allocation5], 512
    $region25: #{detector_forward.1} parent=1 // pred_fallthru
      _
    %v45 = vlaneseq
    %v46 = vand.u32 %v45, 127
    %v47 = vld [vmem:[%s0] sm:$0x3]
    %48 = vset.pattern.permute.xlu0 0
    %49 = vperm.xlu0 %48, %v47
    %v50 = vpop.permute.xlu0 %49
    %vm51 = vcmp.eq.s32.totalorder %v50, %v46
    %v52 = vsel %vm51, 1, 0
    %v53 = vcvt.s32.f32 %v52
    %v54 = vld [vmem:[#allocation2] sm:$0xff]
    %v55 = vld [vmem:[#allocation2 + $0x8] sm:$0xff]
    %vm56 = vcmask 130048
    %v58 = vsel %vm56, %v53, 0
    %60 = vmatprep.subr.mxu0 0.0
    %61 = vmatpush1.msra.mxu0 0.0
    %62 = vmatprep.subr.mxu0 0.0
    %63 = vmatpush1.msra.mxu0 0.0
    %64 = vmatprep.subr.mxu0 0.0
    %65 = vmatpush1.msra.mxu0 0.0
    %66 = vmatprep.subr.mxu0 0.0
    %67 = vmatpush1.msra.mxu0 0.0
    %68 = vmatprep.subr.mxu0 0.0
    %69 = vmatpush1.msra.mxu0 0.0
    %70 = vmatprep.subr.mxu0 0.0
    %71 = vmatpush1.msra.mxu0 0.0
    %72 = vmatprep.subr.mxu0 0.0
    %73 = vmatpush1.msra.mxu0 0.0
    %74 = vmatprep.subr.mxu0 0.0
    %75 = vmatpush1.msra.mxu0 0.0
    %76 = vmatprep.subr.mxu0 0.0
    %77 = vmatpush1.msra.mxu0 0.0
    %78 = vmatprep.subr.mxu0 0.0
    %79 = vmatpush1.msra.mxu0 0.0
    %80 = vmatprep.subr.mxu0 0.0
    %81 = vmatpush1.msra.mxu0 0.0
    %82 = vmatprep.subr.mxu0 0.0
    %83 = vmatpush1.msra.mxu0 0.0
    %84 = vmatprep.subr.mxu0 0.0
    %85 = vmatpush1.msra.mxu0 0.0
    %86 = vmatprep.subr.mxu0 0.0
    %87 = vmatpush1.msra.mxu0 0.0
    %88 = vmatprep.subr.mxu0 0.0
    %89 = vmatpush1.msra.mxu0 %v55
    %90 = vmatprep.subr.mxu0 0.0
    %91 = vmatpush1.msra.mxu0 %v54
    %92 = vmatprep.subr.mxu0 0.0
    %93 = vmatpush2.msra.mxu0 0.0
    %94 = vmatprep.subr.mxu0 0.0
    %95 = vmatpush2.msra.mxu0 0.0
    %96 = vmatprep.subr.mxu0 0.0
    %97 = vmatpush2.msra.mxu0 0.0
    %98 = vmatprep.subr.mxu0 0.0
    %99 = vmatpush2.msra.mxu0 0.0
    %100 = vmatprep.subr.mxu0 0.0
    %101 = vmatpush2.msra.mxu0 0.0
    %102 = vmatprep.subr.mxu0 0.0
    %103 = vmatpush2.msra.mxu0 0.0
    %104 = vmatprep.subr.mxu0 0.0
    %105 = vmatpush2.msra.mxu0 0.0
    %106 = vmatprep.subr.mxu0 0.0
    %107 = vmatpush2.msra.mxu0 0.0
    %108 = vmatprep.subr.mxu0 0.0
    %109 = vmatpush2.msra.mxu0 0.0
    %110 = vmatprep.subr.mxu0 0.0
    %111 = vmatpush2.msra.mxu0 0.0
    %112 = vmatprep.subr.mxu0 0.0
    %113 = vmatpush2.msra.mxu0 0.0
    %114 = vmatprep.subr.mxu0 0.0
    %115 = vmatpush2.msra.mxu0 0.0
    %116 = vmatprep.subr.mxu0 0.0
    %117 = vmatpush2.msra.mxu0 0.0
    %118 = vmatprep.subr.mxu0 0.0
    %119 = vmatpush2.msra.mxu0 0.0
    %120 = vmatprep.subr.mxu0 0.0
    %121 = vmatpush2.msra.mxu0 0.0
    %122 = vmatprep.subr.mxu0 0.0
    %123 = vmatpush2.msra.mxu0 0.0
    %124 = vmatprep.mubr.f32.mxu0 0.0
    %125 = vmatmul.mubr.f32.gmra.mxu0 %v58
    %v126 = vpop.f32.mrf.mxu0
    %v127 = vadd.f32 0.0, %v126
    %v128 = vpop.f32.mrf.mxu0
    %129 = vdwg.mxu0
    %v130 = vld [vmem:[#allocation4] sm:$0xff]
    %v131 = vld [vmem:[#allocation4 + $0x8] sm:$0xff]
    %v132 = vld [vmem:[#allocation4 + $0x10] sm:$0xff]
    %v133 = vld [vmem:[#allocation4 + $0x18] sm:$0xff]
    %v134 = vld [vmem:[%s3] sm:$0x1]
    %v136 = vlaneseq
    %v137 = vshrl.u32 %v136, 7
    %v138 = vsub.s32 0, %v137
    %v139 = vrot.slane %v134, %v138
    %vm141 = vcmask 261120
    %v143 = vsel %vm141, %v127, 0
    %145 = vmatprep.subr.mxu0 0.0
    %146 = vmatpush1.msra.mxu0 0.0
    %147 = vmatprep.subr.mxu0 0.0
    %148 = vmatpush1.msra.mxu0 0.0
    %149 = vmatprep.subr.mxu0 0.0
    %150 = vmatpush1.msra.mxu0 0.0
    %151 = vmatprep.subr.mxu0 0.0
    %152 = vmatpush1.msra.mxu0 0.0
    %153 = vmatprep.subr.mxu0 0.0
    %154 = vmatpush1.msra.mxu0 0.0
    %155 = vmatprep.subr.mxu0 0.0
    %156 = vmatpush1.msra.mxu0 0.0
    %157 = vmatprep.subr.mxu0 0.0
    %158 = vmatpush1.msra.mxu0 0.0
    %159 = vmatprep.subr.mxu0 0.0
    %160 = vmatpush1.msra.mxu0 0.0
    %161 = vmatprep.subr.mxu0 0.0
    %162 = vmatpush1.msra.mxu0 0.0
    %163 = vmatprep.subr.mxu0 0.0
    %164 = vmatpush1.msra.mxu0 0.0
    %165 = vmatprep.subr.mxu0 0.0
    %166 = vmatpush1.msra.mxu0 0.0
    %167 = vmatprep.subr.mxu0 0.0
    %168 = vmatpush1.msra.mxu0 0.0
    %169 = vmatprep.subr.mxu0 0.0
    %170 = vmatpush1.msra.mxu0 %v133
    %171 = vmatprep.subr.mxu0 0.0
    %172 = vmatpush1.msra.mxu0 %v132
    %173 = vmatprep.subr.mxu0 0.0
    %174 = vmatpush1.msra.mxu0 %v131
    %175 = vmatprep.subr.mxu0 0.0
    %176 = vmatpush1.msra.mxu0 %v130
    %177 = vmatprep.subr.mxu0 0.0
    %178 = vmatpush2.msra.mxu0 0.0
    %179 = vmatprep.subr.mxu0 0.0
    %180 = vmatpush2.msra.mxu0 0.0
    %181 = vmatprep.subr.mxu0 0.0
    %182 = vmatpush2.msra.mxu0 0.0
    %183 = vmatprep.subr.mxu0 0.0
    %184 = vmatpush2.msra.mxu0 0.0
    %185 = vmatprep.subr.mxu0 0.0
    %186 = vmatpush2.msra.mxu0 0.0
    %187 = vmatprep.subr.mxu0 0.0
    %188 = vmatpush2.msra.mxu0 0.0
    %189 = vmatprep.subr.mxu0 0.0
    %190 = vmatpush2.msra.mxu0 0.0
    %191 = vmatprep.subr.mxu0 0.0
    %192 = vmatpush2.msra.mxu0 0.0
    %193 = vmatprep.subr.mxu0 0.0
    %194 = vmatpush2.msra.mxu0 0.0
    %195 = vmatprep.subr.mxu0 0.0
    %196 = vmatpush2.msra.mxu0 0.0
    %197 = vmatprep.subr.mxu0 0.0
    %198 = vmatpush2.msra.mxu0 0.0
    %199 = vmatprep.subr.mxu0 0.0
    %200 = vmatpush2.msra.mxu0 0.0
    %201 = vmatprep.subr.mxu0 0.0
    %202 = vmatpush2.msra.mxu0 0.0
    %203 = vmatprep.subr.mxu0 0.0
    %204 = vmatpush2.msra.mxu0 0.0
    %205 = vmatprep.subr.mxu0 0.0
    %206 = vmatpush2.msra.mxu0 0.0
    %207 = vmatprep.subr.mxu0 0.0
    %208 = vmatpush2.msra.mxu0 0.0
    %209 = vmatprep.mubr.f32.mxu0 0.0
    %210 = vmatmul.mubr.f32.gmra.mxu0 %v143
    %v211 = vpop.f32.mrf.mxu0
    %v212 = vadd.f32 %v139, %v211
    %v213 = vpop.f32.mrf.mxu0
    %214 = vdwg.mxu0
    %v215 = vtanh.pop %v212
    %v216 = vmul.f32 %v215, 1.5
    %vm217 = vcmask 58368
    %v218 = vsel %vm217, %v216, -inf
    %219 = vmax.xlane.f32.xlu0 %v218
    %v220 = vpop.xlane.xlu0 %219
    %v221 = vsel %vm217, %v216, inf
    %222 = vmin.xlane.f32.xlu0 %v221
    %v223 = vpop.xlane.xlu0 %222
    %v224 = vadd.f32 %v220, %v223
    %v225 = vmul.f32 %v224, 0.5
    %v226 = vsub.f32 %v216, %v225
    %227 = vset.pattern.permute.xlu0 32
    %228 = vperm.xlu0 %227, %v127
    %v229 = vpop.permute.xlu0 %228
    %v231 = vmul.f32 %v229, %v226
    %232 = vset.pattern.permute.xlu0 33
    %233 = vperm.xlu0 %232, %v127
    %v234 = vpop.permute.xlu0 %233
    %v236 = vadd.f32 %v231, %v234
    %vm237 = vcmask 123968
    %v238 = vsel %vm237, %v216, -inf
    %239 = vmax.xlane.f32.xlu0 %v238
    %v240 = vpop.xlane.xlu0 %239
    %v241 = vsel %vm237, %v216, inf
    %242 = vmin.xlane.f32.xlu0 %v241
    %v243 = vpop.xlane.xlu0 %242
    %v244 = vadd.f32 %v240, %v243
    %v245 = vmul.f32 %v244, 0.5
    %v246 = vsub.f32 %v216, %v245
    %v247 = vmul.f32 %v229, %v246
    %248 = vset.pattern.permute.xlu0 34
    %249 = vperm.xlu0 %248, %v127
    %v250 = vpop.permute.xlu0 %249
    %v252 = vadd.f32 %v247, %v250
    %vm253 = vcmask 189568
    %v254 = vsel %vm253, %v216, -inf
    %255 = vmax.xlane.f32.xlu0 %v254
    %v256 = vpop.xlane.xlu0 %255
    %v257 = vsel %vm253, %v216, inf
    %258 = vmin.xlane.f32.xlu0 %v257
    %v259 = vpop.xlane.xlu0 %258
    %v260 = vadd.f32 %v256, %v259
    %v261 = vmul.f32 %v260, 0.5
    %v262 = vsub.f32 %v216, %v261
    %v263 = vmul.f32 %v229, %v262
    %264 = vset.pattern.permute.xlu0 35
    %265 = vperm.xlu0 %264, %v127
    %v266 = vpop.permute.xlu0 %265
    %v268 = vadd.f32 %v263, %v266
    %v269 = vmul.f32 %v212, %v212
    %271 = vrot.lane.b32.xlu0 %v269, 120
    %v272 = vpop.permute.xlu0 %271
    %v274 = vadd.f32 %v269, %v272
    %275 = vrot.lane.b32.xlu0 %v269, 112
    %v276 = vpop.permute.xlu0 %275
    %v278 = vadd.f32 %v274, %v276
    %279 = vrot.lane.b32.xlu0 %v269, 104
    %v280 = vpop.permute.xlu0 %279
    %v282 = vadd.f32 %v278, %v280
    %v283 = vmax.f32 %v282, 1e-24
    %v284 = vrsqrt.pop %v283
    %286 = vrot.lane.b32.xlu0 %v284, 104
    %v287 = vpop.permute.xlu0 %286
    %289 = vrot.lane.b32.xlu0 %v284, 112
    %v290 = vpop.permute.xlu0 %289
    %292 = vrot.lane.b32.xlu0 %v284, 120
    %v293 = vpop.permute.xlu0 %292
    %vm295 = vcmask 64512
    %v296 = vsel %vm295, %v287, %v290
    %v297 = vsel %vm56, %v296, %v293
    %vm298 = vcmask 195584
    %v299 = vsel %vm298, %v297, %v284
    %301 = vrot.lane.b32.xlu0 %v299, 24
    %v302 = vpop.permute.xlu0 %301
    %v304 = vmul.f32 %v212, %v302
    %v305 = vxor.u32 %v212, 2147483648
    %v306 = vmul.f32 %v305, 1.442695
    %v307 = vpow.pop %v306
    %v308 = vadd.f32 %v307, 1.0
    %v309 = vrcp.pop %v308
    %v310 = vmul.f32 1.0, %v309
    %312 = vrot.lane.b32.xlu0 %v236, 24
    %v313 = vpop.permute.xlu0 %312
    %316 = vrot.lane.b32.xlu0 %v252, 24
    %v317 = vpop.permute.xlu0 %316
    %320 = vrot.lane.b32.xlu0 %v268, 24
    %v321 = vpop.permute.xlu0 %320
    %324 = vrot.lane.b32.xlu0 %v304, 24
    %v325 = vpop.permute.xlu0 %324
    %328 = vrot.lane.b32.xlu0 %v310, 24
    %v329 = vpop.permute.xlu0 %328
    %331 = vrot.lane.b32.xlu0 %v127, 88
    %v332 = vpop.permute.xlu0 %331
    %v334 = vsel %vm295, %v226, %v246
    %v335 = vsel %vm56, %v334, %v262
    %v336 = vsel %vm298, %v335, %v313
    %v337 = vsel %vm141, %v336, %v317
    %vm338 = vcmask 326656
    %v339 = vsel %vm338, %v337, %v321
    %vm340 = vcmask 392192
    %v341 = vsel %vm340, %v339, %v325
    %vm342 = vcmask 654336
    %v343 = vsel %vm342, %v341, %v329
    %vm344 = vcmask 719872
    %v345 = vsel %vm344, %v343, %v332
    %vm346 = vcmask 982016
    %v347 = vsel %vm346, %v345, 0.0
    %348 = vst [vmem:[%s4] sm:$0x3] %v347
    // Predicated region
    $region26: #{detector_forward.1} parent=1 // pred_check
      _
    $region27: #{detector_forward.1} parent=1 // pred_check_branch
      %350 = sbr.rel (0) target = $region29
    $region28: #{detector_forward.1} parent=1 // pred_region
      _
    $region29: #{detector_forward.1} parent=1 // pred_fallthru
      _
    // Predicated region
    $region30: #{detector_forward.1} parent=1 // pred_check
      _
    $region31: #{detector_forward.1} parent=1 // pred_check_branch
      %352 = sbr.rel (0) target = $region33
    $region32: #{detector_forward.1} parent=1 // pred_region
      _
    $region33: #{detector_forward.1} parent=1 // pred_fallthru
      _
    %353 = vsyncpa [#allocation3], 1
    %354 = vsyncpa [#allocation5], 1

</llo_original>
